<compile_context>
chip_gen: v5e
topology: v5e:2x2
jax: 0.10.0
libtpu: 0.0.40
codegen_flags: <defaults>
</compile_context>

<pallas_src>
import functools

import jax
import jax.numpy as jnp
from jax.experimental import pallas as pl
from jax.experimental.pallas import tpu as pltpu


def _round_up(x: int, m: int) -> int:
    return (x + m - 1) // m * m


def _linear_kernel(x_ref, w_ref, b_ref, o_ref):
    # x_ref: (TB, d)  w_ref: (d, 128)  b_ref: (1, 128)  o_ref: (TB, out_features)
    acc = jnp.dot(x_ref[...], w_ref[...], preferred_element_type=jnp.float32)
    acc = acc + b_ref[...]
    # Compact (masked) store of only the real out_features lanes.
    o_ref[...] = acc[:, : o_ref.shape[1]].astype(o_ref.dtype)


def _choose_batch_tile(batch: int, d: int, itemsize: int) -> int:
    """Pick a batch tile: ~8 MiB of x per tile, multiple of 8, >=2 grid steps."""
    row_bytes = max(d * itemsize, 1)
    cap_rows = max(8, ((8 << 20) // row_bytes) // 8 * 8)  # ~8 MiB x tile
    b8 = _round_up(batch, 8)
    # Split the batch into at least two tiles when possible so v7x's two
    # TensorCores both get work ("parallel" batch axis).
    tb = b8 if b8 < 16 else _round_up(pl.cdiv(b8, 2), 8)
    return min(cap_rows, tb)


@functools.partial(jax.jit, static_argnames=("out_features",))
def _linear_probe_apply(x, w_t, b_pad, *, out_features):
    B, d = x.shape
    n_pad = w_t.shape[1]
    itemsize = jnp.dtype(x.dtype).itemsize
    tb = _choose_batch_tile(B, d, itemsize)
    grid = (pl.cdiv(B, tb),)

    return pl.pallas_call(
        _linear_kernel,
        out_shape=jax.ShapeDtypeStruct((B, out_features), x.dtype),
        grid_spec=pl.GridSpec(
            grid=grid,
            in_specs=[
                pl.BlockSpec((tb, d), lambda i: (i, 0)),       # x: tiled over batch
                pl.BlockSpec((d, n_pad), lambda i: (0, 0)),    # W^T: VMEM-resident
                pl.BlockSpec((1, n_pad), lambda i: (0, 0)),    # bias: VMEM-resident
            ],
            out_specs=pl.BlockSpec((tb, out_features), lambda i: (i, 0)),
        ),
        compiler_params=pltpu.CompilerParams(
            dimension_semantics=("parallel",),    # megacore sharding on v7x
            vmem_limit_bytes=48 * 1024 * 1024,    # explicit (v5e default is 16 MiB)
        ),
        cost_estimate=pl.CostEstimate(
            flops=2 * B * d * n_pad,
            transcendentals=0,
            bytes_accessed=(B * d + d * n_pad + B * out_features) * itemsize,
        ),
    )(x, w_t, b_pad)


def make_linear_probing(weight, bias):
    """Builds LinearProbing.forward: y = x @ weight.T + bias (nn.Linear(d, 10)).

    The one-time weight transpose + zero-pad of the N axis up to 128 lanes
    happens here (module "init"), not inside the per-call forward path.
    Weight stays in its own (f32) dtype — no silent downcast to x.dtype.
    """
    out_features, d = weight.shape
    n_pad = _round_up(out_features, 128)
    w_t = jnp.zeros((d, n_pad), dtype=weight.dtype).at[:, :out_features].set(weight.T)
    b_pad = jnp.zeros((1, n_pad), dtype=jnp.float32).at[:, :out_features].set(
        bias.astype(jnp.float32))

    def forward(x):
        return _linear_probe_apply(x, w_t, b_pad, out_features=out_features)

    return forward


if __name__ == "__main__":
    key = jax.random.PRNGKey(0)
    k_x, k_w, k_b = jax.random.split(key, 3)

    B, d, out_features = 8, 32, 10

    # Deterministic "PyTorch-style" init: U(-1/sqrt(d), 1/sqrt(d)).
    bound = 1.0 / float(d) ** 0.5
    weight = jax.random.uniform(k_w, (out_features, d), jnp.float32, -bound, bound)
    bias = jax.random.uniform(k_b, (out_features,), jnp.float32, -bound, bound)
    x = jax.random.normal(k_x, (B, d), jnp.float32)

    forward = make_linear_probing(weight, bias)
    y = forward(x)
    jax.block_until_ready(y)

    # Cross-check against plain-JAX reference of nn.Linear semantics.
    y_ref = x @ weight.T + bias
    assert y.shape == (B, out_features)
    assert jnp.allclose(y, y_ref, atol=1e-5, rtol=1e-5)

    print("KERNEL_OK")
</pallas_src>

<mosaic_0001>
module attributes {stable_mosaic.version = 11 : i64} {
  func.func @_linear_kernel(%arg0: i32, %arg1: memref<8x32xf32, #tpu.memory_space<vmem>>, %arg2: memref<32x128xf32, #tpu.memory_space<vmem>>, %arg3: memref<1x128xf32, #tpu.memory_space<vmem>>, %arg4: memref<8x10xf32, #tpu.memory_space<vmem>>) attributes {dimension_semantics = [#tpu.dimension_semantics<parallel>], iteration_bounds = array<i64: 1>, scalar_prefetch = 0 : i64, scratch_operands = 0 : i64, tpu.core_type = #tpu.core_type<tc>, window_params = [{transform_indices = @transform_0, window_bounds = array<i64: 8, 32>}, {pipeline_mode = #tpu.pipeline_mode<synchronous>, transform_indices = @transform_1, window_bounds = array<i64: 32, 128>}, {pipeline_mode = #tpu.pipeline_mode<synchronous>, transform_indices = @transform_2, window_bounds = array<i64: 1, 128>}, {transform_indices = @transform_3, window_bounds = array<i64: 8, 10>}]} {
    %c0 = arith.constant 0 : index
    %c0_0 = arith.constant 0 : index
    %0 = vector.load %arg1[%c0, %c0_0] : memref<8x32xf32, #tpu.memory_space<vmem>>, vector<8x32xf32>
    %c0_1 = arith.constant 0 : index
    %c0_2 = arith.constant 0 : index
    %1 = vector.load %arg2[%c0_1, %c0_2] : memref<32x128xf32, #tpu.memory_space<vmem>>, vector<32x128xf32>
    %cst = arith.constant dense<0.000000e+00> : vector<8x128xf32>
    %2 = tpu.matmul %0, %1, %cst {dimension_numbers = #tpu.dot_dimension_numbers<[1], [0], [0], [1], [0, 0, 1, 1], [], []>} : vector<8x32xf32>, vector<32x128xf32>, vector<8x128xf32> -> vector<8x128xf32>
    %c0_3 = arith.constant 0 : index
    %c0_4 = arith.constant 0 : index
    %3 = vector.load %arg3[%c0_3, %c0_4] : memref<1x128xf32, #tpu.memory_space<vmem>>, vector<1x128xf32>
    %4 = vector.broadcast %3 : vector<1x128xf32> to vector<8x128xf32>
    %5 = arith.addf %2, %4 : vector<8x128xf32>
    %6 = vector.extract_strided_slice %5 {offsets = [0, 0], sizes = [8, 10], strides = [1, 1]} : vector<8x128xf32> to vector<8x10xf32>
    %c0_5 = arith.constant 0 : index
    %c0_6 = arith.constant 0 : index
    %7 = vector.load %arg4[%c0_5, %c0_6] : memref<8x10xf32, #tpu.memory_space<vmem>>, vector<8x10xf32>
    tpu.vector_store %arg4[%c0_5, %c0_6], %6 {strides = array<i32>} : memref<8x10xf32, #tpu.memory_space<vmem>>, vector<8x10xf32>,
    return
  }
  func.func @transform_0(%arg0: i32) -> (i32, i32) {
    %c0_i32 = arith.constant 0 : i32
    %c0_i32_0 = arith.constant 0 : i32
    return %arg0, %c0_i32 : i32, i32
  }
  func.func @transform_1(%arg0: i32) -> (i32, i32) {
    %c0_i32 = arith.constant 0 : i32
    %c0_i32_0 = arith.constant 0 : i32
    %c0_i32_1 = arith.constant 0 : i32
    return %c0_i32, %c0_i32_0 : i32, i32
  }
  func.func @transform_2(%arg0: i32) -> (i32, i32) {
    %c0_i32 = arith.constant 0 : i32
    %c0_i32_0 = arith.constant 0 : i32
    %c0_i32_1 = arith.constant 0 : i32
    return %c0_i32, %c0_i32_0 : i32, i32
  }
  func.func @transform_3(%arg0: i32) -> (i32, i32) {
    %c0_i32 = arith.constant 0 : i32
    %c0_i32_0 = arith.constant 0 : i32
    return %arg0, %c0_i32 : i32, i32
  }
}

</mosaic_0001>

<llo_original>
// kernel: _linear_probe_apply.1
$region0: #{_linear_probe_apply.1}
  #allocation0 [shape = 'u32[]', space=smem, size = 0x4, offset = 0x4, fixed_abs, tag = 'smem constant byte address 0x4 - core index']
  #allocation1 [shape = 'u32[72,128]{1,0:T(1,128)}', space=vmem, size = 0x9000, scoped, tag = 'internal scratch']
  %s0 = inlined_call_operand.hbm [shape: f32[8,32], index: 0, kind: input, shape index: {}]
  %s1 = inlined_call_operand.hbm [shape: f32[32,128], index: 1, kind: input, shape index: {}]
  %s2 = inlined_call_operand.vmem [shape: f32[1,128], index: 2, kind: input, shape index: {}]
  %s3 = inlined_call_operand.hbm [shape: f32[8,10], index: 3, kind: output, shape index: {}]
  %s4 = sld [smem:[#allocation0]]
  $region30: #{_linear_probe_apply.1} parent=0
    _
  %s6 = ssub.s32 1, %s4
  %s7 = scalar_select 0, %s6, %s4
  $region1: #{_linear_probe_apply.1} parent=0
    #allocation2 [shape = 'u8[4096]{0}', space=vmem, size = 0x1000, scoped, tag = 'input window, operand 0, single buffered']
    #allocation3 [shape = 's32[1]{0}', space=sflag, size = 0x4, scoped, tag = 'scoped memory for _linear_probe_apply.1']
    #allocation4 [shape = 's32[1]{0}', space=sflag, size = 0x4, scoped, tag = 'scoped memory for _linear_probe_apply.1']
    #allocation5 [shape = 'u8[16384]{0}', space=vmem, size = 0x4000, scoped, tag = 'input window, operand 1, single buffered']
    #allocation6 [shape = 's32[1]{0}', space=sflag, size = 0x4, scoped, tag = 'scoped memory for _linear_probe_apply.1']
    #allocation7 [shape = 'u8[4096]{0}', space=vmem, size = 0x1000, scoped, tag = 'output window, operand 0, single buffered']
    %8 = vsyncpa [#allocation3], 0
    %9 = vsyncpa [#allocation6], 0
    %10 = vsyncpa [#allocation4], 0
    // Predicated region
    $region2: #{_linear_probe_apply.1} parent=1 // pred_check
      _
    $region3: #{_linear_probe_apply.1} parent=1 // pred_check_branch
      %12 = sbr.rel (0) target = $region5
    $region4: #{_linear_probe_apply.1} parent=1 // pred_region
      %14 = vsyncadd [#allocation3], 0
      %s16 = sshll.u32 %s0, 4
      %s17 = int_to_ptr.hbm [resolvable:$true] %s16
      %s18 = sshll.u32 [#allocation2], 4
      %s19 = int_to_ptr.vmem [resolvable:$true] %s18
      %21 = dma.hbm_to_vmem [thread:$0]  %s17, 128, %s19, [#allocation3]
    $region5: #{_linear_probe_apply.1} parent=1 // pred_fallthru
      _
    // Predicated region
    $region6: #{_linear_probe_apply.1} parent=1 // pred_check
      _
    $region7: #{_linear_probe_apply.1} parent=1 // pred_check_branch
      %23 = sbr.rel (0) target = $region9
    $region8: #{_linear_probe_apply.1} parent=1 // pred_region
      %25 = vsyncadd [#allocation6], 0
      %s26 = sshll.u32 %s1, 4
      %s27 = int_to_ptr.hbm [resolvable:$true] %s26
      %s28 = sshll.u32 [#allocation5], 4
      %s29 = int_to_ptr.vmem [resolvable:$true] %s28
      %34 = dma.hbm_to_vmem [thread:$0]  %s27, 512, %s29, [#allocation6], 128, 128, 8
    $region9: #{_linear_probe_apply.1} parent=1 // pred_fallthru
      _
    // Predicated region
    $region10: #{_linear_probe_apply.1} parent=1 // pred_check
      _
    $region11: #{_linear_probe_apply.1} parent=1 // pred_check_branch
      %36 = sbr.rel (0) target = $region13
    $region12: #{_linear_probe_apply.1} parent=1 // pred_region
      _
    $region13: #{_linear_probe_apply.1} parent=1 // pred_fallthru
      _
    // Predicated region
    $region14: #{_linear_probe_apply.1} parent=1 // pred_check
      _
    $region15: #{_linear_probe_apply.1} parent=1 // pred_check_branch
      %38 = sbr.rel (0) target = $region17
    $region16: #{_linear_probe_apply.1} parent=1 // pred_region
      %40 = dma.done [#allocation3], 128
    $region17: #{_linear_probe_apply.1} parent=1 // pred_fallthru
      _
    // Predicated region
    $region18: #{_linear_probe_apply.1} parent=1 // pred_check
      _
    $region19: #{_linear_probe_apply.1} parent=1 // pred_check_branch
      %42 = sbr.rel (0) target = $region21
    $region20: #{_linear_probe_apply.1} parent=1 // pred_region
      %44 = dma.done [#allocation6], 512
    $region21: #{_linear_probe_apply.1} parent=1 // pred_fallthru
      _
    %v45 = vld [vmem:[#allocation2] sm:$0xff]
    %v46 = vld [vmem:[#allocation5] sm:$0xff]
    %v47 = vld [vmem:[#allocation5 + $0x8] sm:$0xff]
    %v48 = vld [vmem:[#allocation5 + $0x10] sm:$0xff]
    %v49 = vld [vmem:[#allocation5 + $0x18] sm:$0xff]
    %v50 = vld [vmem:[%s2] sm:$0x1]
    %v52 = vperm.slane %v50, 0
    %vm54 = vcmask 261120
    %v56 = vsel %vm54, %v45, 0
    %58 = vmatpush.msra.mxu0 0.0
    %59 = vmatpush.msra.mxu0 0.0
    %60 = vmatpush.msra.mxu0 0.0
    %61 = vmatpush.msra.mxu0 0.0
    %62 = vmatpush.msra.mxu0 0.0
    %63 = vmatpush.msra.mxu0 0.0
    %64 = vmatpush.msra.mxu0 0.0
    %65 = vmatpush.msra.mxu0 0.0
    %66 = vmatpush.msra.mxu0 0.0
    %67 = vmatpush.msra.mxu0 0.0
    %68 = vmatpush.msra.mxu0 0.0
    %69 = vmatpush.msra.mxu0 0.0
    %70 = vmatpush.msra.mxu0 %v49
    %71 = vmatpush.msra.mxu0 %v48
    %72 = vmatpush.msra.mxu0 %v47
    %73 = vmatpush.msra.mxu0 %v46
    %74 = vmatmul.f32.gmra.mxu0 %v56
    %v75 = vpop.f32.mrf.mxu0
    %v76 = vadd.f32 %v52, %v75
    %77 = vdwg.mxu0
    %vm78 = vcmask 80896
    %79 = vst.msk [vmem:[#allocation7] sm:$0xff] %vm78, %v76
    // Predicated region
    $region22: #{_linear_probe_apply.1} parent=1 // pred_check
      _
    $region23: #{_linear_probe_apply.1} parent=1 // pred_check_branch
      %81 = sbr.rel (0) target = $region25
    $region24: #{_linear_probe_apply.1} parent=1 // pred_region
      %83 = vsyncadd [#allocation4], 0
      %s85 = sshll.u32 [#allocation7], 4
      %s86 = int_to_ptr.vmem [resolvable:$true] %s85
      %s87 = sshll.u32 %s3, 4
      %s88 = int_to_ptr.hbm [resolvable:$true] %s87
      %90 = dma.vmem_to_hbm [thread:$0]  %s86, 128, %s88, [#allocation4]
    $region25: #{_linear_probe_apply.1} parent=1 // pred_fallthru
      _
    // Predicated region
    $region26: #{_linear_probe_apply.1} parent=1 // pred_check
      _
    $region27: #{_linear_probe_apply.1} parent=1 // pred_check_branch
      %92 = sbr.rel (0) target = $region29
    $region28: #{_linear_probe_apply.1} parent=1 // pred_region
      %94 = dma.done [#allocation4], 128
    $region29: #{_linear_probe_apply.1} parent=1 // pred_fallthru
      _
    %95 = vsyncpa [#allocation3], 1
    %96 = vsyncpa [#allocation6], 1
    %97 = vsyncpa [#allocation4], 1

</llo_original>
